<compile_context>
chip_gen: v5e
topology: v5e:2x2
jax: 0.10.0
libtpu: 0.0.40
codegen_flags: <defaults>
</compile_context>

<pallas_src>
import functools

import jax
import jax.numpy as jnp
from jax import lax
from jax.experimental import pallas as pl
from jax.experimental.pallas import tpu as pltpu


def target_embedding_kernel(ids_ref, table_ref, out_ref, *, num_labels):
    # ids_ref: (TN, 1) int32 token ids for this tile.
    ids = ids_ref[...]                                             # (TN, 1)
    # one-hot(ids) @ fused_table == full Embedding->MLP lookup.  iota is a single
    # (1, NL) vreg; broadcasting in the compare does the rest.  Because the
    # one-hot entries are exactly 0/1, the MXU matmul is exact row selection.
    col = lax.broadcasted_iota(jnp.int32, (1, num_labels), 1)      # (1, NL)
    onehot = (ids == col).astype(table_ref.dtype)                  # (TN, NL)
    out = jnp.dot(onehot, table_ref[...],
                  preferred_element_type=jnp.float32)              # (TN, dim) f32
    out_ref[...] = out.astype(out_ref.dtype)


def _tensorcores_per_chip():
    """Best-effort chip detection: only v7x has 2 TensorCores per chip."""
    try:
        kind = jax.devices()[0].device_kind.lower()
        return 2 if "7" in kind else 1
    except Exception:
        return 1


def target_embedding(t, table, w1, b1, w2, b2, *, tile_tokens=1024,
                     out_dtype=jnp.float32):
    """t: int token ids, any shape. Returns (*t.shape, dim) in out_dtype."""
    num_labels, d_model = table.shape
    dim = w1.shape[1]

    # --- fold the entire MLP into a per-label table (tiny; runs once in XLA) ---
    hp = lax.Precision.HIGHEST
    h = jnp.dot(table.astype(jnp.float32), w1.astype(jnp.float32),
                precision=hp) + b1.astype(jnp.float32)             # (NL, dim)
    h = jax.nn.gelu(h, approximate=False)                          # exact erf == nn.GELU()
    out_table = jnp.dot(h, w2.astype(jnp.float32),
                        precision=hp) + b2.astype(jnp.float32)     # (NL, dim) f32

    orig_shape = t.shape
    ids = t.reshape(-1).astype(jnp.int32)
    n = ids.shape[0]

    def round_up(x, m):
        return ((x + m - 1) // m) * m

    # --- tile sizing -------------------------------------------------------
    tile = max(8, (int(tile_tokens) // 8) * 8)
    if _tensorcores_per_chip() >= 2 and n >= 16:
        # v7x only: keep >= 2 grid steps so both TensorCores get work.
        tile = min(tile, max(8, round_up(-(-n // 2), 8)))
    tile = min(tile, round_up(max(n, 1), 8))        # never over-pad tiny inputs
    n_pad = round_up(max(n, 1), tile)
    grid = (n_pad // tile,)

    ids = jnp.pad(ids, (0, n_pad - n)).reshape(n_pad, 1)

    # --- VMEM budget: double-buffered ids + out tiles, resident table, headroom
    out_itemsize = jnp.dtype(out_dtype).itemsize
    vmem_limit = int(min(32 << 20,
                         max(4 << 20,
                             2 * tile * (4 + dim * out_itemsize)
                             + 2 * num_labels * dim * 4
                             + (2 << 20))))

    out = pl.pallas_call(
        functools.partial(target_embedding_kernel, num_labels=num_labels),
        out_shape=jax.ShapeDtypeStruct((n_pad, dim), out_dtype),
        grid_spec=pltpu.PrefetchScalarGridSpec(
            num_scalar_prefetch=0,
            grid=grid,
            in_specs=[
                pl.BlockSpec((tile, 1), lambda i: (i, 0)),            # token ids
                pl.BlockSpec((num_labels, dim), lambda i: (0, 0)),    # fused table (resident)
            ],
            out_specs=pl.BlockSpec((tile, dim), lambda i: (i, 0)),    # unpadded output
        ),
        compiler_params=pltpu.CompilerParams(
            dimension_semantics=("parallel",),
            vmem_limit_bytes=vmem_limit),
    )(ids, out_table)

    if n_pad != n:
        out = out[:n]
    return out.reshape(*orig_shape, dim)


def reference(t, table, w1, b1, w2, b2):
    hp = lax.Precision.HIGHEST
    emb = table[t]                                   # row 0 is zeros (padding_idx)
    h = jax.nn.gelu(jnp.dot(emb, w1, precision=hp) + b1, approximate=False)
    return jnp.dot(h, w2, precision=hp) + b2


if __name__ == "__main__":
    # Module hyper-params (small, consistent with __init__:  d_model % 2 == 0).
    num_labels, d_model, dim = 12, 32, 32
    B, S = 2, 8

    key = jax.random.PRNGKey(0)
    k_tab, k_w1, k_b1, k_w2, k_b2, k_t = jax.random.split(key, 6)

    table = jax.random.normal(k_tab, (num_labels, d_model), jnp.float32)
    table = table.at[0].set(0.0)                     # padding_idx=0 -> zero row
    # nn.Linear stores weight (out, in); pre-transposed here to (in, out) for x @ W.
    w1 = jax.random.normal(k_w1, (d_model, dim), jnp.float32) * 0.1
    b1 = jax.random.normal(k_b1, (dim,), jnp.float32) * 0.1
    w2 = jax.random.normal(k_w2, (dim, dim), jnp.float32) * 0.1
    b2 = jax.random.normal(k_b2, (dim,), jnp.float32) * 0.1

    # Token ids, including some padding (0) entries.
    t = jax.random.randint(k_t, (B, S), 0, num_labels, dtype=jnp.int32)
    t = t.at[0, 0].set(0)

    # 1) default f32 output: matches the f32 module semantics tightly.
    out = target_embedding(t, table, w1, b1, w2, b2)
    out = jax.block_until_ready(out)
    ref = reference(t, table, w1, b1, w2, b2)
    assert out.shape == (B, S, dim), out.shape
    assert jnp.allclose(out, ref, atol=1e-4, rtol=1e-4), \
        float(jnp.abs(out - ref).max())

    # 2) bf16 output path (halves writeback bytes on the writeback-bound kernel).
    out_bf = target_embedding(t, table, w1, b1, w2, b2, out_dtype=jnp.bfloat16)
    out_bf = jax.block_until_ready(out_bf)
    assert jnp.allclose(out_bf.astype(jnp.float32), ref, atol=2e-2, rtol=2e-2), \
        float(jnp.abs(out_bf.astype(jnp.float32) - ref).max())

    print("KERNEL_OK")
</pallas_src>

<mosaic_0001>
module attributes {stable_mosaic.version = 11 : i64} {
  func.func @target_embedding_kernel(%arg0: i32, %arg1: memref<16x1xi32, #tpu.memory_space<vmem>>, %arg2: memref<12x32xf32, #tpu.memory_space<vmem>>, %arg3: memref<16x32xf32, #tpu.memory_space<vmem>>) attributes {dimension_semantics = [#tpu.dimension_semantics<parallel>], iteration_bounds = array<i64: 1>, scalar_prefetch = 0 : i64, scratch_operands = 0 : i64, tpu.core_type = #tpu.core_type<tc>, window_params = [{transform_indices = @transform_0, window_bounds = array<i64: 16, 1>}, {pipeline_mode = #tpu.pipeline_mode<synchronous>, transform_indices = @transform_1, window_bounds = array<i64: 12, 32>}, {transform_indices = @transform_2, window_bounds = array<i64: 16, 32>}]} {
    %c0 = arith.constant 0 : index
    %c0_0 = arith.constant 0 : index
    %0 = vector.load %arg1[%c0, %c0_0] : memref<16x1xi32, #tpu.memory_space<vmem>>, vector<16x1xi32>
    %1 = tpu.iota {dimensions = array<i32: 1>} : vector<1x12xi32>
    %2 = vector.broadcast %0 : vector<16x1xi32> to vector<16x12xi32>
    %3 = vector.broadcast %1 : vector<1x12xi32> to vector<16x12xi32>
    %4 = arith.cmpi eq, %2, %3 : vector<16x12xi32>
    %5 = arith.extui %4 : vector<16x12xi1> to vector<16x12xi32>
    %6 = arith.sitofp %5 : vector<16x12xi32> to vector<16x12xf32>
    %c0_1 = arith.constant 0 : index
    %c0_2 = arith.constant 0 : index
    %7 = vector.load %arg2[%c0_1, %c0_2] : memref<12x32xf32, #tpu.memory_space<vmem>>, vector<12x32xf32>
    %cst = arith.constant dense<0.000000e+00> : vector<16x32xf32>
    %8 = tpu.matmul %6, %7, %cst {dimension_numbers = #tpu.dot_dimension_numbers<[1], [0], [0], [1], [0, 0, 1, 1], [], []>} : vector<16x12xf32>, vector<12x32xf32>, vector<16x32xf32> -> vector<16x32xf32>
    %c0_3 = arith.constant 0 : index
    %c0_4 = arith.constant 0 : index
    %9 = vector.load %arg3[%c0_3, %c0_4] : memref<16x32xf32, #tpu.memory_space<vmem>>, vector<16x32xf32>
    tpu.vector_store %arg3[%c0_3, %c0_4], %8 {strides = array<i32>} : memref<16x32xf32, #tpu.memory_space<vmem>>, vector<16x32xf32>,
    return
  }
  func.func @transform_0(%arg0: i32) -> (i32, i32) {
    %c0_i32 = arith.constant 0 : i32
    %c0_i32_0 = arith.constant 0 : i32
    return %arg0, %c0_i32 : i32, i32
  }
  func.func @transform_1(%arg0: i32) -> (i32, i32) {
    %c0_i32 = arith.constant 0 : i32
    %c0_i32_0 = arith.constant 0 : i32
    %c0_i32_1 = arith.constant 0 : i32
    return %c0_i32, %c0_i32_0 : i32, i32
  }
  func.func @transform_2(%arg0: i32) -> (i32, i32) {
    %c0_i32 = arith.constant 0 : i32
    %c0_i32_0 = arith.constant 0 : i32
    return %arg0, %c0_i32 : i32, i32
  }
}

</mosaic_0001>

<llo_original>
// kernel: tpu_custom_call.1
$region0: #{tpu_custom_call.1}
  #allocation0 [shape = 'u32[]', space=smem, size = 0x4, offset = 0x4, fixed_abs, tag = 'smem constant byte address 0x4 - core index']
  #allocation1 [shape = 'u32[72,128]{1,0:T(1,128)}', space=vmem, size = 0x9000, scoped, tag = 'internal scratch']
  %s0 = inlined_call_operand.vmem [shape: s32[16,1], index: 0, kind: input, shape index: {}]
  %s1 = inlined_call_operand.vmem [shape: f32[12,32], index: 1, kind: input, shape index: {}]
  %s2 = inlined_call_operand.hbm [shape: f32[16,32], index: 2, kind: output, shape index: {}]
  %s3 = sld [smem:[#allocation0]]
  $region18: #{tpu_custom_call.1} parent=0
    _
  %s5 = ssub.s32 1, %s3
  %s6 = scalar_select 0, %s5, %s3
  $region1: #{tpu_custom_call.1} parent=0
    #allocation2 [shape = 'u8[8192]{0}', space=vmem, size = 0x2000, scoped, tag = 'output window, operand 0, single buffered']
    #allocation3 [shape = 's32[1]{0}', space=sflag, size = 0x4, scoped, tag = 'scoped memory for tpu_custom_call.1']
    %7 = vsyncpa [#allocation3], 0
    // Predicated region
    $region2: #{tpu_custom_call.1} parent=1 // pred_check
      _
    $region3: #{tpu_custom_call.1} parent=1 // pred_check_branch
      %9 = sbr.rel (0) target = $region5
    $region4: #{tpu_custom_call.1} parent=1 // pred_region
      _
    $region5: #{tpu_custom_call.1} parent=1 // pred_fallthru
      _
    // Predicated region
    $region6: #{tpu_custom_call.1} parent=1 // pred_check
      _
    $region7: #{tpu_custom_call.1} parent=1 // pred_check_branch
      %11 = sbr.rel (0) target = $region9
    $region8: #{tpu_custom_call.1} parent=1 // pred_region
      _
    $region9: #{tpu_custom_call.1} parent=1 // pred_fallthru
      _
    %v12 = vld [vmem:[%s0] sm:$0xff]
    %v13 = vld [vmem:[%s0 + $0x8] sm:$0xff]
    %v14 = vlaneseq
    %v15 = vand.u32 %v14, 127
    %16 = vset.pattern.permute.xlu0 0
    %17 = vperm.xlu0 %16, %v12
    %v18 = vpop.permute.xlu0 %17
    %19 = vset.pattern.permute.xlu0 0
    %20 = vperm.xlu0 %19, %v13
    %v21 = vpop.permute.xlu0 %20
    %vm22 = vcmp.eq.s32.totalorder %v18, %v15
    %vm23 = vcmp.eq.s32.totalorder %v21, %v15
    %v24 = vsel %vm22, 1, 0
    %v25 = vsel %vm23, 1, 0
    %v26 = vcvt.s32.f32 %v24
    %v27 = vcvt.s32.f32 %v25
    %v28 = vld [vmem:[%s1] sm:$0xff]
    %v29 = vld [vmem:[%s1 + $0x8] sm:$0xf]
    %vm30 = vcmask 97280
    %v32 = vsel %vm30, %v26, 0
    %v35 = vsel %vm30, %v27, 0
    %vm37 = vcmask 1043456
    %v39 = vsel %vm37, %v29, 0
    %41 = vmatpush.msra.mxu0 0.0
    %42 = vmatpush.msra.mxu0 0.0
    %43 = vmatpush.msra.mxu0 0.0
    %44 = vmatpush.msra.mxu0 0.0
    %45 = vmatpush.msra.mxu0 0.0
    %46 = vmatpush.msra.mxu0 0.0
    %47 = vmatpush.msra.mxu0 0.0
    %48 = vmatpush.msra.mxu0 0.0
    %49 = vmatpush.msra.mxu0 0.0
    %50 = vmatpush.msra.mxu0 0.0
    %51 = vmatpush.msra.mxu0 0.0
    %52 = vmatpush.msra.mxu0 0.0
    %53 = vmatpush.msra.mxu0 0.0
    %54 = vmatpush.msra.mxu0 0.0
    %55 = vmatpush.msra.mxu0 %v39
    %56 = vmatpush.msra.mxu0 %v28
    %57 = vmatmul.f32.gmra.mxu0 %v32
    %v58 = vpop.f32.mrf.mxu0
    %v59 = vadd.f32 0.0, %v58
    %60 = vmatmul.f32.gmra.mxu0 %v35
    %v61 = vpop.f32.mrf.mxu0
    %v62 = vadd.f32 0.0, %v61
    %63 = vdwg.mxu0
    %vm64 = vcmask 261120
    %65 = vst.msk [vmem:[#allocation2] sm:$0xff] %vm64, %v59
    %66 = vst.msk [vmem:[#allocation2 + $0x8] sm:$0xff] %vm64, %v62
    // Predicated region
    $region10: #{tpu_custom_call.1} parent=1 // pred_check
      _
    $region11: #{tpu_custom_call.1} parent=1 // pred_check_branch
      %68 = sbr.rel (0) target = $region13
    $region12: #{tpu_custom_call.1} parent=1 // pred_region
      %70 = vsyncadd [#allocation3], 0
      %s71 = sshll.u32 [#allocation2], 4
      %s72 = int_to_ptr.vmem [resolvable:$true] %s71
      %s73 = sshll.u32 %s2, 4
      %s74 = int_to_ptr.hbm [resolvable:$true] %s73
      %79 = dma.vmem_to_hbm [thread:$0]  %s72, 256, %s74, [#allocation3], 128, 128, 8
    $region13: #{tpu_custom_call.1} parent=1 // pred_fallthru
      _
    // Predicated region
    $region14: #{tpu_custom_call.1} parent=1 // pred_check
      _
    $region15: #{tpu_custom_call.1} parent=1 // pred_check_branch
      %81 = sbr.rel (0) target = $region17
    $region16: #{tpu_custom_call.1} parent=1 // pred_region
      %83 = dma.done [#allocation3], 256
    $region17: #{tpu_custom_call.1} parent=1 // pred_fallthru
      _
    %84 = vsyncpa [#allocation3], 1

</llo_original>
